<compile_context>
chip_gen: v7x
topology: tpu7x:2x2x1
jax: 0.10.0
libtpu: 0.0.40
codegen_flags: <defaults>
</compile_context>

<pallas_src>
import functools

import jax
import jax.numpy as jnp
from jax.experimental import pallas as pl
from jax.experimental.pallas import tpu as pltpu

LN_EPS = 1e-6   # config.layer_norm_eps (synthetic config)


# ---------------------------------------------------------------------------
# Kernel
# ---------------------------------------------------------------------------
def _make_kernel(num_f_blocks):
    """SwiGLU -> LayerNorm -> output projection.

    grid = (row_tiles, num_f_blocks).  The F axis is "arbitrary" (serial) and
    streams (D, tf) blocks of w1/w3.  LayerNorm gamma/beta are pre-folded into
    w2/b2, so the epilogue is just (h - mean) * rstd followed by the w2 matmul.
    """
    nF = num_f_blocks

    def kernel(x_ref, w1_ref, b1_ref, w3_ref, b3_ref, w2_ref, b2_ref,
               o_ref, *scratch):
        F = w2_ref.shape[0]
        inv_f = jnp.float32(1.0 / F)
        # bf16 cast in-kernel (saves a full wrapper-side HBM pass over x).
        x = x_ref[...].astype(jnp.bfloat16)

        def gate(w1, b1, w3, b3):
            h1 = jnp.dot(x, w1, preferred_element_type=jnp.float32) + b1
            h3 = jnp.dot(x, w3, preferred_element_type=jnp.float32) + b3
            return (h1 * jax.nn.sigmoid(h1)) * h3          # SiLU(h1) * h3, f32

        if nF == 1:
            # Fully-resident weights: single fused pass, no scratch round-trip.
            h = gate(w1_ref[...], b1_ref[...], w3_ref[...], b3_ref[...])
            s1 = jnp.sum(h, axis=-1, keepdims=True)          # one-pass LN stats
            s2 = jnp.sum(h * h, axis=-1, keepdims=True)
            mean = s1 * inv_f
            var = jnp.maximum(s2 * inv_f - mean * mean, 0.0)
            hn = ((h - mean) * jax.lax.rsqrt(var + LN_EPS)).astype(w2_ref.dtype)
            o = jnp.dot(hn, w2_ref[...], preferred_element_type=jnp.float32)
            o_ref[...] = (o + b2_ref[...]).astype(o_ref.dtype)
            return

        # F-streamed path: stage SwiGLU blocks + accumulate LN statistics,
        # normalize and project once the whole hidden row is available.
        h_scr, s1_scr, s2_scr = scratch
        tf = w1_ref.shape[-1]
        k = pl.program_id(1)

        @pl.when(k == 0)
        def _init():
            s1_scr[...] = jnp.zeros_like(s1_scr)
            s2_scr[...] = jnp.zeros_like(s2_scr)

        h = gate(w1_ref[...], b1_ref[...], w3_ref[...], b3_ref[...])
        h_scr[k] = h
        s1_scr[...] += jnp.sum(h, axis=-1, keepdims=True)
        s2_scr[...] += jnp.sum(h * h, axis=-1, keepdims=True)

        @pl.when(k == nF - 1)
        def _finalize():
            mean = s1_scr[...] * inv_f
            var = jnp.maximum(s2_scr[...] * inv_f - mean * mean, 0.0)
            rstd = jax.lax.rsqrt(var + LN_EPS)
            acc = jnp.zeros(o_ref.shape, jnp.float32)
            for kk in range(nF):                              # static unroll
                hn_k = ((h_scr[kk] - mean) * rstd).astype(w2_ref.dtype)
                acc = acc + jnp.dot(hn_k, w2_ref[kk * tf:(kk + 1) * tf, :],
                                    preferred_element_type=jnp.float32)
            o_ref[...] = (acc + b2_ref[...]).astype(o_ref.dtype)

    return kernel


# ---------------------------------------------------------------------------
# Host-side (trace-time) configuration helpers
# ---------------------------------------------------------------------------
def _round_up(n, m):
    return ((n + m - 1) // m) * m


def _chip_info():
    """(num_tensorcores_per_chip, vmem_capacity_bytes).  Pure host-side query."""
    try:
        kind = jax.devices()[0].device_kind.lower()
    except Exception:
        kind = ""
    is_v7 = ("v7" in kind) or ("tpu7" in kind)
    try:
        vmem = int(pltpu.get_tpu_info().vmem_capacity_bytes)
    except Exception:
        vmem = (64 << 20) if is_v7 else (128 << 20)
    return (2 if is_v7 else 1), vmem


def _choose_row_tiling(rows, num_tc, tm_max):
    """Row tile + padded row count.

    * 1-TC chips (v5e/v6e): fewest serial grid steps (one step when rows fit) —
      the grid is a loop on a single core, extra steps only add overhead + padding.
    * 2-TC chips (v7x): number of steps is a multiple of 2 so the "parallel"
      row axis splits evenly across both TensorCores.
    """
    steps = num_tc * max(1, -(-rows // (num_tc * tm_max)))
    tm = _round_up(-(-rows // steps), 8)
    return tm, tm * steps


def _choose_f_blocks(D, F, tm, x_itemsize, out_itemsize, vmem_budget, forced=None):
    """Smallest number of F blocks whose VMEM footprint fits the budget."""
    candidates = [n for n in (1, 2, 4, 8, 16, 32, 64) if F % (n * 128) == 0]
    if forced is not None:
        assert forced in candidates, f"num_f_blocks={forced} must keep tf a multiple of 128"
        candidates = [forced]

    def footprint(nF):
        tf = F // nF
        b = 2 * 2 * D * tf * 2            # w1 + w3 blocks, double-buffered, bf16
        b += 2 * 2 * tf * 4               # b1 + b3 blocks
        b += 2 * F * D * 2 + 2 * D * 4    # resident w2 (+ b2), 2 pipeline buffers
        b += 2 * tm * D * x_itemsize      # x tiles
        b += 2 * tm * D * out_itemsize    # output tiles
        b += 6 * tm * tf * 4              # f32 intermediates (h1/h3/h/hn, ...)
        if nF > 1:
            b += tm * F * 4 + 4 * tm * 4  # staged-h scratch + LN statistics
        return b

    for nF in candidates:
        if footprint(nF) <= vmem_budget:
            return nF, footprint(nF)
    nF = candidates[-1]
    # TODO(synk): at extreme F even the resident bf16 w2 + staged-h scratch can
    # exceed VMEM; that regime additionally needs w2 streamed over a second pass
    # of the F grid axis with a (tm, D) output accumulator.
    return nF, footprint(nF)


# ---------------------------------------------------------------------------
# Wrapper
# ---------------------------------------------------------------------------
def visual_mlp(x, params, *, out_dtype=jnp.bfloat16, num_f_blocks=None):
    """Pallas forward of UlusageDocDetVisualMLP.

    x: (batch, seq, D).  params: see make_params() — w1/b1/w3/b3 plus w2/b2
    with LayerNorm gamma/beta pre-folded.  Matmuls use bf16 operands with f32
    accumulation (documented deviation from PyTorch's f32 Linear path).
    jit-safe: no host syncs, no probes, all config decided from static shapes.
    """
    B, S, D = x.shape
    F = params["w2"].shape[0]
    assert params["w1"].shape == (D, F) and params["w3"].shape == (D, F)
    assert params["w2"].shape == (F, D)

    num_tc, vmem_cap = _chip_info()
    vmem_budget = min(vmem_cap - (16 << 20), 100 << 20)   # headroom for compiler scratch
    tm_max = 128 if num_tc == 2 else 256                  # v7x: halve f32 intermediates

    rows = B * S
    tm, padded_rows = _choose_row_tiling(rows, num_tc, tm_max)

    x2d = x.reshape(rows, D)              # NO dtype cast here: cast happens in-kernel
    if padded_rows != rows:
        x2d = jnp.pad(x2d, ((0, padded_rows - rows), (0, 0)))

    out_dtype = jnp.dtype(out_dtype)
    nF, footprint = _choose_f_blocks(D, F, tm, x2d.dtype.itemsize,
                                     out_dtype.itemsize, vmem_budget,
                                     forced=num_f_blocks)
    tf = F // nF
    grid = (padded_rows // tm, nF)

    scratch_shapes = []
    if nF > 1:
        scratch_shapes = [pltpu.VMEM((nF, tm, tf), jnp.float32),  # staged h blocks
                          pltpu.VMEM((tm, 1), jnp.float32),       # sum(h)
                          pltpu.VMEM((tm, 1), jnp.float32)]       # sum(h*h)

    weight_bytes = sum(int(params[k].size) * params[k].dtype.itemsize
                       for k in ("w1", "b1", "w3", "b3", "w2", "b2"))
    cost = pl.CostEstimate(
        flops=int(6 * padded_rows * D * F),                 # two gate + one out matmul
        transcendentals=int(padded_rows * F),               # exp per SiLU element
        bytes_accessed=int(padded_rows * D * (x2d.dtype.itemsize + out_dtype.itemsize)
                           + weight_bytes * (grid[0] if nF > 1 else 1)),
    )

    out2d = pl.pallas_call(
        _make_kernel(nF),
        out_shape=jax.ShapeDtypeStruct((padded_rows, D), out_dtype),
        grid_spec=pltpu.PrefetchScalarGridSpec(
            num_scalar_prefetch=0,
            grid=grid,
            in_specs=[
                pl.BlockSpec((tm, D), lambda i, k: (i, 0)),   # x rows (constant in k)
                pl.BlockSpec((D, tf), lambda i, k: (0, k)),   # w1 column block
                pl.BlockSpec((1, tf), lambda i, k: (0, k)),   # b1 block
                pl.BlockSpec((D, tf), lambda i, k: (0, k)),   # w3 column block
                pl.BlockSpec((1, tf), lambda i, k: (0, k)),   # b3 block
                pl.BlockSpec((F, D), lambda i, k: (0, 0)),    # w2 (gamma folded), resident
                pl.BlockSpec((1, D), lambda i, k: (0, 0)),    # b2 (beta folded)
            ],
            out_specs=pl.BlockSpec((tm, D), lambda i, k: (i, 0)),
            scratch_shapes=scratch_shapes,
        ),
        compiler_params=pltpu.CompilerParams(
            dimension_semantics=("parallel", "arbitrary"),
            vmem_limit_bytes=int(min(vmem_budget, max(32 << 20, footprint + (8 << 20)))),
        ),
        cost_estimate=cost,
    )(x2d, params["w1"], params["b1"], params["w3"], params["b3"],
      params["w2"], params["b2"])

    return out2d[:rows].reshape(B, S, D)


# ---------------------------------------------------------------------------
# Parameters (mirrors the PyTorch module's __init__)
# ---------------------------------------------------------------------------
def make_params(key, in_features):
    """Weights as in the PyTorch module (biases zeroed, LayerNorm default init),
    stored transposed to (in, out), with the LN affine folded into w2/b2:
        (hn*gamma + beta) @ W2 + b2 == hn @ (gamma[:,None]*W2) + (beta @ W2 + b2)
    Exact for the default gamma=1/beta=0; for trained gamma the fold applies
    gamma at bf16 weight precision (documented choice)."""
    ffn = int(2 * 4 * in_features / 3)
    multiple_of = 256
    ffn = multiple_of * ((ffn + multiple_of - 1) // multiple_of)

    k1, k2, k3 = jax.random.split(key, 3)
    scale = 0.02
    w1 = scale * jax.random.normal(k1, (in_features, ffn), jnp.float32)
    w3 = scale * jax.random.normal(k3, (in_features, ffn), jnp.float32)
    w2 = scale * jax.random.normal(k2, (ffn, in_features), jnp.float32)
    b1 = jnp.zeros((1, ffn), jnp.float32)
    b3 = jnp.zeros((1, ffn), jnp.float32)
    b2 = jnp.zeros((1, in_features), jnp.float32)
    gamma = jnp.ones((ffn,), jnp.float32)      # nn.LayerNorm default init
    beta = jnp.zeros((ffn,), jnp.float32)

    w2_folded = gamma[:, None] * w2
    b2_folded = b2 + beta[None, :] @ w2

    params = {
        "w1": w1.astype(jnp.bfloat16), "b1": b1,
        "w3": w3.astype(jnp.bfloat16), "b3": b3,
        "w2": w2_folded.astype(jnp.bfloat16), "b2": b2_folded,
    }
    # Un-folded pieces so the reference reproduces the *original* module math.
    ref_params = {
        "w1": w1.astype(jnp.bfloat16), "b1": b1,
        "w3": w3.astype(jnp.bfloat16), "b3": b3,
        "w2": w2.astype(jnp.bfloat16), "b2": b2,
        "gamma": gamma[None, :], "beta": beta[None, :],
    }
    return params, ref_params, ffn


def _reference(x, p):
    """Pure-JAX reference of the original module (bf16 matmul operands, f32 math)."""
    B, S, D = x.shape
    xb = x.reshape(-1, D).astype(jnp.bfloat16)
    h1 = jnp.dot(xb, p["w1"], preferred_element_type=jnp.float32) + p["b1"]
    h3 = jnp.dot(xb, p["w3"], preferred_element_type=jnp.float32) + p["b3"]
    h = (h1 * jax.nn.sigmoid(h1)) * h3
    mean = jnp.mean(h, -1, keepdims=True)
    var = jnp.mean((h - mean) ** 2, -1, keepdims=True)
    hn = (h - mean) * jax.lax.rsqrt(var + LN_EPS) * p["gamma"] + p["beta"]
    out = jnp.dot(hn.astype(jnp.bfloat16), p["w2"],
                  preferred_element_type=jnp.float32) + p["b2"]
    return out.reshape(B, S, D)


if __name__ == "__main__":
    key = jax.random.PRNGKey(0)
    kx, kp = jax.random.split(key)

    # high_reso_cross_hid_size = 128 -> ffn_hidden = 512; seq=9 exercises the
    # row-padding path (rows=18 -> padded to a row-tile multiple).
    batch, seq, in_features = 2, 9, 128
    params, ref_params, ffn = make_params(kp, in_features)
    x = jax.random.normal(kx, (batch, seq, in_features), jnp.float32)

    ref = _reference(x, ref_params)

    # 1) auto-configured path (weights fully resident at this size), under jit.
    mlp = jax.jit(functools.partial(visual_mlp, params=params))
    out = jax.block_until_ready(mlp(x))
    assert out.shape == (batch, seq, in_features) and out.dtype == jnp.bfloat16
    err = float(jnp.max(jnp.abs(out.astype(jnp.float32) - ref)))
    assert jnp.allclose(out.astype(jnp.float32), ref, atol=2e-2, rtol=2e-2), (
        f"resident-weight path mismatch vs reference, max abs err = {err}")

    # 2) force the F-streaming path (2 column blocks of w1/w3) + f32 output so
    #    the large-model code path is exercised on-device as well.
    out_stream = jax.block_until_ready(
        visual_mlp(x, params, num_f_blocks=2, out_dtype=jnp.float32))
    err2 = float(jnp.max(jnp.abs(out_stream - ref)))
    assert jnp.allclose(out_stream, ref, atol=2e-2, rtol=2e-2), (
        f"F-streaming path mismatch vs reference, max abs err = {err2}")

    print("KERNEL_OK")
</pallas_src>

<mosaic_0001>
module attributes {stable_mosaic.version = 11 : i64} {
  func.func @kernel(%arg0: i32, %arg1: i32, %arg2: memref<24x128xf32, #tpu.memory_space<vmem>>, %arg3: memref<128x512xbf16, #tpu.memory_space<vmem>>, %arg4: memref<1x512xf32, #tpu.memory_space<vmem>>, %arg5: memref<128x512xbf16, #tpu.memory_space<vmem>>, %arg6: memref<1x512xf32, #tpu.memory_space<vmem>>, %arg7: memref<512x128xbf16, #tpu.memory_space<vmem>>, %arg8: memref<1x128xf32, #tpu.memory_space<vmem>>, %arg9: memref<24x128xbf16, #tpu.memory_space<vmem>>) attributes {dimension_semantics = [#tpu.dimension_semantics<parallel>, #tpu.dimension_semantics<arbitrary>], iteration_bounds = array<i64: 1, 1>, scalar_prefetch = 0 : i64, scratch_operands = 0 : i64, tpu.core_type = #tpu.core_type<tc>, window_params = [{transform_indices = @transform_0, window_bounds = array<i64: 24, 128>}, {transform_indices = @transform_1, window_bounds = array<i64: 128, 512>}, {transform_indices = @transform_2, window_bounds = array<i64: 1, 512>}, {transform_indices = @transform_3, window_bounds = array<i64: 128, 512>}, {transform_indices = @transform_4, window_bounds = array<i64: 1, 512>}, {pipeline_mode = #tpu.pipeline_mode<synchronous>, transform_indices = @transform_5, window_bounds = array<i64: 512, 128>}, {pipeline_mode = #tpu.pipeline_mode<synchronous>, transform_indices = @transform_6, window_bounds = array<i64: 1, 128>}, {transform_indices = @transform_7, window_bounds = array<i64: 24, 128>}]} {
    %c0 = arith.constant 0 : index
    %c0_0 = arith.constant 0 : index
    %0 = vector.load %arg2[%c0, %c0_0] : memref<24x128xf32, #tpu.memory_space<vmem>>, vector<24x128xf32>
    %1 = arith.truncf %0 : vector<24x128xf32> to vector<24x128xbf16>
    %c0_1 = arith.constant 0 : index
    %c0_2 = arith.constant 0 : index
    %2 = vector.load %arg3[%c0_1, %c0_2] : memref<128x512xbf16, #tpu.memory_space<vmem>>, vector<128x512xbf16>
    %c0_3 = arith.constant 0 : index
    %c0_4 = arith.constant 0 : index
    %3 = vector.load %arg4[%c0_3, %c0_4] : memref<1x512xf32, #tpu.memory_space<vmem>>, vector<1x512xf32>
    %c0_5 = arith.constant 0 : index
    %c0_6 = arith.constant 0 : index
    %4 = vector.load %arg5[%c0_5, %c0_6] : memref<128x512xbf16, #tpu.memory_space<vmem>>, vector<128x512xbf16>
    %c0_7 = arith.constant 0 : index
    %c0_8 = arith.constant 0 : index
    %5 = vector.load %arg6[%c0_7, %c0_8] : memref<1x512xf32, #tpu.memory_space<vmem>>, vector<1x512xf32>
    %cst = arith.constant dense<0.000000e+00> : vector<24x512xf32>
    %6 = tpu.matmul %1, %2, %cst {dimension_numbers = #tpu.dot_dimension_numbers<[1], [0], [0], [1], [0, 0, 1, 1], [], []>} : vector<24x128xbf16>, vector<128x512xbf16>, vector<24x512xf32> -> vector<24x512xf32>
    %7 = vector.broadcast %3 : vector<1x512xf32> to vector<24x512xf32>
    %8 = arith.addf %6, %7 : vector<24x512xf32>
    %cst_9 = arith.constant dense<0.000000e+00> : vector<24x512xf32>
    %9 = tpu.matmul %1, %4, %cst_9 {dimension_numbers = #tpu.dot_dimension_numbers<[1], [0], [0], [1], [0, 0, 1, 1], [], []>} : vector<24x128xbf16>, vector<128x512xbf16>, vector<24x512xf32> -> vector<24x512xf32>
    %10 = vector.broadcast %5 : vector<1x512xf32> to vector<24x512xf32>
    %11 = arith.addf %9, %10 : vector<24x512xf32>
    %12 = arith.negf %8 : vector<24x512xf32>
    %13 = math.exp %12 : vector<24x512xf32>
    %cst_10 = arith.constant 1.000000e+00 : f32
    %14 = vector.broadcast %cst_10 : f32 to vector<24x512xf32>
    %15 = arith.addf %14, %13 : vector<24x512xf32>
    %16 = arith.divf %14, %15 : vector<24x512xf32>
    %17 = arith.mulf %8, %16 : vector<24x512xf32>
    %18 = arith.mulf %17, %11 : vector<24x512xf32>
    %cst_11 = arith.constant dense<0.000000e+00> : vector<24xf32>
    %19 = vector.multi_reduction <add>, %18, %cst_11 [1] : vector<24x512xf32> to vector<24xf32>
    %20 = vector.shape_cast %19 : vector<24xf32> to vector<24x1xf32>
    %21 = arith.mulf %18, %18 : vector<24x512xf32>
    %cst_12 = arith.constant dense<0.000000e+00> : vector<24xf32>
    %22 = vector.multi_reduction <add>, %21, %cst_12 [1] : vector<24x512xf32> to vector<24xf32>
    %23 = vector.shape_cast %22 : vector<24xf32> to vector<24x1xf32>
    %cst_13 = arith.constant 0.001953125 : f32
    %24 = vector.broadcast %cst_13 : f32 to vector<24x1xf32>
    %25 = arith.mulf %20, %24 : vector<24x1xf32>
    %cst_14 = arith.constant 0.001953125 : f32
    %26 = vector.broadcast %cst_14 : f32 to vector<24x1xf32>
    %27 = arith.mulf %23, %26 : vector<24x1xf32>
    %28 = arith.mulf %25, %25 : vector<24x1xf32>
    %29 = arith.subf %27, %28 : vector<24x1xf32>
    %cst_15 = arith.constant 0.000000e+00 : f32
    %30 = vector.broadcast %cst_15 : f32 to vector<24x1xf32>
    %31 = arith.maximumf %29, %30 : vector<24x1xf32>
    %32 = vector.broadcast %25 : vector<24x1xf32> to vector<24x512xf32>
    %33 = arith.subf %18, %32 : vector<24x512xf32>
    %cst_16 = arith.constant 9.99999997E-7 : f32
    %34 = vector.broadcast %cst_16 : f32 to vector<24x1xf32>
    %35 = arith.addf %31, %34 : vector<24x1xf32>
    %36 = math.rsqrt %35 : vector<24x1xf32>
    %37 = vector.broadcast %36 : vector<24x1xf32> to vector<24x512xf32>
    %38 = arith.mulf %33, %37 : vector<24x512xf32>
    %39 = arith.truncf %38 : vector<24x512xf32> to vector<24x512xbf16>
    %c0_17 = arith.constant 0 : index
    %c0_18 = arith.constant 0 : index
    %40 = vector.load %arg7[%c0_17, %c0_18] : memref<512x128xbf16, #tpu.memory_space<vmem>>, vector<512x128xbf16>
    %cst_19 = arith.constant dense<0.000000e+00> : vector<24x128xf32>
    %41 = tpu.matmul %39, %40, %cst_19 {dimension_numbers = #tpu.dot_dimension_numbers<[1], [0], [0], [1], [0, 0, 1, 1], [], []>} : vector<24x512xbf16>, vector<512x128xbf16>, vector<24x128xf32> -> vector<24x128xf32>
    %c0_20 = arith.constant 0 : index
    %c0_21 = arith.constant 0 : index
    %42 = vector.load %arg8[%c0_20, %c0_21] : memref<1x128xf32, #tpu.memory_space<vmem>>, vector<1x128xf32>
    %43 = vector.broadcast %42 : vector<1x128xf32> to vector<24x128xf32>
    %44 = arith.addf %41, %43 : vector<24x128xf32>
    %45 = arith.truncf %44 : vector<24x128xf32> to vector<24x128xbf16>
    %c0_22 = arith.constant 0 : index
    %c0_23 = arith.constant 0 : index
    %46 = vector.load %arg9[%c0_22, %c0_23] : memref<24x128xbf16, #tpu.memory_space<vmem>>, vector<24x128xbf16>
    tpu.vector_store %arg9[%c0_22, %c0_23], %45 {strides = array<i32>} : memref<24x128xbf16, #tpu.memory_space<vmem>>, vector<24x128xbf16>,
    return
  }
  func.func @transform_0(%arg0: i32, %arg1: i32) -> (i32, i32) {
    %c0_i32 = arith.constant 0 : i32
    %c0_i32_0 = arith.constant 0 : i32
    return %arg0, %c0_i32 : i32, i32
  }
  func.func @transform_1(%arg0: i32, %arg1: i32) -> (i32, i32) {
    %c0_i32 = arith.constant 0 : i32
    %c0_i32_0 = arith.constant 0 : i32
    return %c0_i32, %arg1 : i32, i32
  }
  func.func @transform_2(%arg0: i32, %arg1: i32) -> (i32, i32) {
    %c0_i32 = arith.constant 0 : i32
    %c0_i32_0 = arith.constant 0 : i32
    return %c0_i32, %arg1 : i32, i32
  }
  func.func @transform_3(%arg0: i32, %arg1: i32) -> (i32, i32) {
    %c0_i32 = arith.constant 0 : i32
    %c0_i32_0 = arith.constant 0 : i32
    return %c0_i32, %arg1 : i32, i32
  }
  func.func @transform_4(%arg0: i32, %arg1: i32) -> (i32, i32) {
    %c0_i32 = arith.constant 0 : i32
    %c0_i32_0 = arith.constant 0 : i32
    return %c0_i32, %arg1 : i32, i32
  }
  func.func @transform_5(%arg0: i32, %arg1: i32) -> (i32, i32) {
    %c0_i32 = arith.constant 0 : i32
    %c0_i32_0 = arith.constant 0 : i32
    %c0_i32_1 = arith.constant 0 : i32
    return %c0_i32, %c0_i32_0 : i32, i32
  }
  func.func @transform_6(%arg0: i32, %arg1: i32) -> (i32, i32) {
    %c0_i32 = arith.constant 0 : i32
    %c0_i32_0 = arith.constant 0 : i32
    %c0_i32_1 = arith.constant 0 : i32
    return %c0_i32, %c0_i32_0 : i32, i32
  }
  func.func @transform_7(%arg0: i32, %arg1: i32) -> (i32, i32) {
    %c0_i32 = arith.constant 0 : i32
    %c0_i32_0 = arith.constant 0 : i32
    return %arg0, %c0_i32 : i32, i32
  }
}

</mosaic_0001>

<llo_original>
// kernel: visual_mlp.1
$region0: #{visual_mlp.1}
  #allocation0 [shape = 'u32[]', space=smem, size = 0x4, offset = 0x4, fixed_abs, tag = 'smem constant byte address 0x4 - core index']
  #allocation1 [shape = 'u32[144,128]{1,0:T(1,128)}', space=vmem, size = 0x12000, scoped, tag = 'internal scratch']
  %s0 = inlined_call_operand.vmem [shape: f32[24,128], index: 0, kind: input, shape index: {}]
  %s1 = inlined_call_operand.vmem [shape: bf16[128,512], index: 1, kind: input, shape index: {}]
  %s2 = inlined_call_operand.vmem [shape: f32[1,512], index: 2, kind: input, shape index: {}, may-alias: {2,4}]
  %s3 = inlined_call_operand.vmem [shape: bf16[128,512], index: 3, kind: input, shape index: {}]
  %s4 = inlined_call_operand.vmem [shape: f32[1,512], index: 4, kind: input, shape index: {}, may-alias: {2,4}]
  %s5 = inlined_call_operand.vmem [shape: bf16[512,128], index: 5, kind: input, shape index: {}]
  %s6 = inlined_call_operand.vmem [shape: f32[1,128], index: 6, kind: input, shape index: {}]
  %s7 = inlined_call_operand.vmem [shape: bf16[24,128], index: 7, kind: output, shape index: {}]
  %s8 = sld [smem:[#allocation0]]
  $region38: #{visual_mlp.1} parent=0
    _
  %s10 = ssub.s32 1, %s8
  %s11 = scalar_select 0, %s10, %s8
  // Predicated region
  $region2: #{visual_mlp.1} parent=0 // pred_check
    _
  $region3: #{visual_mlp.1} parent=0 // pred_check_branch
    %13 = sbr.rel (0) target = $region5
  $region4: #{visual_mlp.1} parent=0 // pred_region
    _
  $region5: #{visual_mlp.1} parent=0 // pred_fallthru
    _
  // Predicated region
  $region6: #{visual_mlp.1} parent=0 // pred_check
    _
  $region7: #{visual_mlp.1} parent=0 // pred_check_branch
    %15 = sbr.rel (0) target = $region9
  $region8: #{visual_mlp.1} parent=0 // pred_region
    _
  $region9: #{visual_mlp.1} parent=0 // pred_fallthru
    _
  // Predicated region
  $region10: #{visual_mlp.1} parent=0 // pred_check
    _
  $region11: #{visual_mlp.1} parent=0 // pred_check_branch
    %17 = sbr.rel (0) target = $region13
  $region12: #{visual_mlp.1} parent=0 // pred_region
    _
  $region13: #{visual_mlp.1} parent=0 // pred_fallthru
    _
  // Predicated region
  $region14: #{visual_mlp.1} parent=0 // pred_check
    _
  $region15: #{visual_mlp.1} parent=0 // pred_check_branch
    %19 = sbr.rel (0) target = $region17
  $region16: #{visual_mlp.1} parent=0 // pred_region
    _
  $region17: #{visual_mlp.1} parent=0 // pred_fallthru
    _
  // Predicated region
  $region18: #{visual_mlp.1} parent=0 // pred_check
    _
  $region19: #{visual_mlp.1} parent=0 // pred_check_branch
    %21 = sbr.rel (0) target = $region21
  $region20: #{visual_mlp.1} parent=0 // pred_region
    _
  $region21: #{visual_mlp.1} parent=0 // pred_fallthru
    _
  // Predicated region
  $region22: #{visual_mlp.1} parent=0 // pred_check
    _
  $region23: #{visual_mlp.1} parent=0 // pred_check_branch
    %23 = sbr.rel (0) target = $region25
  $region24: #{visual_mlp.1} parent=0 // pred_region
    _
  $region25: #{visual_mlp.1} parent=0 // pred_fallthru
    _
  // Predicated region
  $region26: #{visual_mlp.1} parent=0 // pred_check
    _
  $region27: #{visual_mlp.1} parent=0 // pred_check_branch
    %25 = sbr.rel (0) target = $region29
  $region28: #{visual_mlp.1} parent=0 // pred_region
    _
  $region29: #{visual_mlp.1} parent=0 // pred_fallthru
    _
  %v27 = vld [vmem:[%s0] sm:$0xff]
  %v28 = vld [vmem:[%s0 + $0x8] sm:$0xff]
  %v29 = vld [vmem:[%s0 + $0x10] sm:$0xff]
  %v30 = vpack.c.bf16 %v28, %v27
  %v31 = vpack.c.bf16 %v29, %v29
  %v32 = vld [vmem:[%s1] sm:$0xff]
  %v33 = vld [vmem:[%s1 + $0x8] sm:$0xff]
  %v34 = vld [vmem:[%s1 + $0x10] sm:$0xff]
  %v35 = vld [vmem:[%s1 + $0x18] sm:$0xff]
  %v36 = vld [vmem:[%s1 + $0x20] sm:$0xff]
  %v37 = vld [vmem:[%s1 + $0x28] sm:$0xff]
  %v38 = vld [vmem:[%s1 + $0x30] sm:$0xff]
  %v39 = vld [vmem:[%s1 + $0x38] sm:$0xff]
  %v40 = vld [vmem:[%s1 + $0x40] sm:$0xff]
  %v41 = vld [vmem:[%s1 + $0x48] sm:$0xff]
  %v42 = vld [vmem:[%s1 + $0x50] sm:$0xff]
  %v43 = vld [vmem:[%s1 + $0x58] sm:$0xff]
  %v44 = vld [vmem:[%s1 + $0x60] sm:$0xff]
  %v45 = vld [vmem:[%s1 + $0x68] sm:$0xff]
  %v46 = vld [vmem:[%s1 + $0x70] sm:$0xff]
  %v47 = vld [vmem:[%s1 + $0x78] sm:$0xff]
  %v48 = vld [vmem:[%s1 + $0x80] sm:$0xff]
  %v49 = vld [vmem:[%s1 + $0x88] sm:$0xff]
  %v50 = vld [vmem:[%s1 + $0x90] sm:$0xff]
  %v51 = vld [vmem:[%s1 + $0x98] sm:$0xff]
  %v52 = vld [vmem:[%s1 + $0xa0] sm:$0xff]
  %v53 = vld [vmem:[%s1 + $0xa8] sm:$0xff]
  %v54 = vld [vmem:[%s1 + $0xb0] sm:$0xff]
  %v55 = vld [vmem:[%s1 + $0xb8] sm:$0xff]
  %v56 = vld [vmem:[%s1 + $0xc0] sm:$0xff]
  %v57 = vld [vmem:[%s1 + $0xc8] sm:$0xff]
  %v58 = vld [vmem:[%s1 + $0xd0] sm:$0xff]
  %v59 = vld [vmem:[%s1 + $0xd8] sm:$0xff]
  %v60 = vld [vmem:[%s1 + $0xe0] sm:$0xff]
  %v61 = vld [vmem:[%s1 + $0xe8] sm:$0xff]
  %v62 = vld [vmem:[%s1 + $0xf0] sm:$0xff]
  %v63 = vld [vmem:[%s1 + $0xf8] sm:$0xff]
  %v64 = vld [vmem:[%s2] sm:$0xf]
  %v65 = vld [vmem:[%s3] sm:$0xff]
  %v66 = vld [vmem:[%s3 + $0x8] sm:$0xff]
  %v67 = vld [vmem:[%s3 + $0x10] sm:$0xff]
  %v68 = vld [vmem:[%s3 + $0x18] sm:$0xff]
  %v69 = vld [vmem:[%s3 + $0x20] sm:$0xff]
  %v70 = vld [vmem:[%s3 + $0x28] sm:$0xff]
  %v71 = vld [vmem:[%s3 + $0x30] sm:$0xff]
  %v72 = vld [vmem:[%s3 + $0x38] sm:$0xff]
  %v73 = vld [vmem:[%s3 + $0x40] sm:$0xff]
  %v74 = vld [vmem:[%s3 + $0x48] sm:$0xff]
  %v75 = vld [vmem:[%s3 + $0x50] sm:$0xff]
  %v76 = vld [vmem:[%s3 + $0x58] sm:$0xff]
  %v77 = vld [vmem:[%s3 + $0x60] sm:$0xff]
  %v78 = vld [vmem:[%s3 + $0x68] sm:$0xff]
  %v79 = vld [vmem:[%s3 + $0x70] sm:$0xff]
  %v80 = vld [vmem:[%s3 + $0x78] sm:$0xff]
  %v81 = vld [vmem:[%s3 + $0x80] sm:$0xff]
  %v82 = vld [vmem:[%s3 + $0x88] sm:$0xff]
  %v83 = vld [vmem:[%s3 + $0x90] sm:$0xff]
  %v84 = vld [vmem:[%s3 + $0x98] sm:$0xff]
  %v85 = vld [vmem:[%s3 + $0xa0] sm:$0xff]
  %v86 = vld [vmem:[%s3 + $0xa8] sm:$0xff]
  %v87 = vld [vmem:[%s3 + $0xb0] sm:$0xff]
  %v88 = vld [vmem:[%s3 + $0xb8] sm:$0xff]
  %v89 = vld [vmem:[%s3 + $0xc0] sm:$0xff]
  %v90 = vld [vmem:[%s3 + $0xc8] sm:$0xff]
  %v91 = vld [vmem:[%s3 + $0xd0] sm:$0xff]
  %v92 = vld [vmem:[%s3 + $0xd8] sm:$0xff]
  %v93 = vld [vmem:[%s3 + $0xe0] sm:$0xff]
  %v94 = vld [vmem:[%s3 + $0xe8] sm:$0xff]
  %v95 = vld [vmem:[%s3 + $0xf0] sm:$0xff]
  %v96 = vld [vmem:[%s3 + $0xf8] sm:$0xff]
  %v97 = vld [vmem:[%s4] sm:$0xf]
  %v99 = vlaneseq
  %v100 = vshrl.u32 %v99, 7
  %v101 = vsub.s32 0, %v100
  %v102 = vrot.slane %v64, %v101
  %v103 = vlaneseq
  %v104 = vshrl.u32 %v103, 7
  %v105 = vsub.s32 1, %v104
  %v106 = vrot.slane %v64, %v105
  %v107 = vlaneseq
  %v108 = vshrl.u32 %v107, 7
  %v109 = vsub.s32 2, %v108
  %v110 = vrot.slane %v64, %v109
  %v111 = vlaneseq
  %v112 = vshrl.u32 %v111, 7
  %v113 = vsub.s32 3, %v112
  %v114 = vrot.slane %v64, %v113
  %v151 = vunpack.c.l.b16 %v32
  %v152 = vunpack.c.h.b16 %v32
  %v153 = vunpack.c.l.b16 %v33
  %v154 = vunpack.c.h.b16 %v33
  %v155 = vunpack.c.l.b16 %v34
  %v156 = vunpack.c.h.b16 %v34
  %v157 = vunpack.c.l.b16 %v35
  %v158 = vunpack.c.h.b16 %v35
  %v159 = vunpack.c.l.b16 %v36
  %v160 = vunpack.c.h.b16 %v36
  %v161 = vunpack.c.l.b16 %v37
  %v162 = vunpack.c.h.b16 %v37
  %v163 = vunpack.c.l.b16 %v38
  %v164 = vunpack.c.h.b16 %v38
  %v165 = vunpack.c.l.b16 %v39
  %v166 = vunpack.c.h.b16 %v39
  %v167 = vunpack.c.l.b16 %v40
  %v168 = vunpack.c.h.b16 %v40
  %v169 = vunpack.c.l.b16 %v41
  %v170 = vunpack.c.h.b16 %v41
  %v171 = vunpack.c.l.b16 %v42
  %v172 = vunpack.c.h.b16 %v42
  %v173 = vunpack.c.l.b16 %v43
  %v174 = vunpack.c.h.b16 %v43
  %v175 = vunpack.c.l.b16 %v44
  %v176 = vunpack.c.h.b16 %v44
  %v177 = vunpack.c.l.b16 %v45
  %v178 = vunpack.c.h.b16 %v45
  %v179 = vunpack.c.l.b16 %v46
  %v180 = vunpack.c.h.b16 %v46
  %v181 = vunpack.c.l.b16 %v47
  %v182 = vunpack.c.h.b16 %v47
  %v183 = vunpack.c.l.b16 %v48
  %v184 = vunpack.c.h.b16 %v48
  %v185 = vunpack.c.l.b16 %v49
  %v186 = vunpack.c.h.b16 %v49
  %v187 = vunpack.c.l.b16 %v50
  %v188 = vunpack.c.h.b16 %v50
  %v189 = vunpack.c.l.b16 %v51
  %v190 = vunpack.c.h.b16 %v51
  %v191 = vunpack.c.l.b16 %v52
  %v192 = vunpack.c.h.b16 %v52
  %v193 = vunpack.c.l.b16 %v53
  %v194 = vunpack.c.h.b16 %v53
  %v195 = vunpack.c.l.b16 %v54
  %v196 = vunpack.c.h.b16 %v54
  %v197 = vunpack.c.l.b16 %v55
  %v198 = vunpack.c.h.b16 %v55
  %v199 = vunpack.c.l.b16 %v56
  %v200 = vunpack.c.h.b16 %v56
  %v201 = vunpack.c.l.b16 %v57
  %v202 = vunpack.c.h.b16 %v57
  %v203 = vunpack.c.l.b16 %v58
  %v204 = vunpack.c.h.b16 %v58
  %v205 = vunpack.c.l.b16 %v59
  %v206 = vunpack.c.h.b16 %v59
  %v207 = vunpack.c.l.b16 %v60
  %v208 = vunpack.c.h.b16 %v60
  %v209 = vunpack.c.l.b16 %v61
  %v210 = vunpack.c.h.b16 %v61
  %v211 = vunpack.c.l.b16 %v62
  %v212 = vunpack.c.h.b16 %v62
  %v213 = vunpack.c.l.b16 %v63
  %v214 = vunpack.c.h.b16 %v63
  %v215 = vpack.c.b16 %v155, %v151
  %v216 = vpack.c.b16 %v156, %v152
  %v217 = vpack.c.b16 %v157, %v153
  %v218 = vpack.c.b16 %v158, %v154
  %v219 = vpack.c.b16 %v163, %v159
  %v220 = vpack.c.b16 %v164, %v160
  %v221 = vpack.c.b16 %v165, %v161
  %v222 = vpack.c.b16 %v166, %v162
  %v223 = vpack.c.b16 %v171, %v167
  %v224 = vpack.c.b16 %v172, %v168
  %v225 = vpack.c.b16 %v173, %v169
  %v226 = vpack.c.b16 %v174, %v170
  %v227 = vpack.c.b16 %v179, %v175
  %v228 = vpack.c.b16 %v180, %v176
  %v229 = vpack.c.b16 %v181, %v177
  %v230 = vpack.c.b16 %v182, %v178
  %v231 = vpack.c.b16 %v187, %v183
  %v232 = vpack.c.b16 %v188, %v184
  %v233 = vpack.c.b16 %v189, %v185
  %v234 = vpack.c.b16 %v190, %v186
  %v235 = vpack.c.b16 %v195, %v191
  %v236 = vpack.c.b16 %v196, %v192
  %v237 = vpack.c.b16 %v197, %v193
  %v238 = vpack.c.b16 %v198, %v194
  %v239 = vpack.c.b16 %v203, %v199
  %v240 = vpack.c.b16 %v204, %v200
  %v241 = vpack.c.b16 %v205, %v201
  %v242 = vpack.c.b16 %v206, %v202
  %v243 = vpack.c.b16 %v211, %v207
  %v244 = vpack.c.b16 %v212, %v208
  %v245 = vpack.c.b16 %v213, %v209
  %v246 = vpack.c.b16 %v214, %v210
  %279 = vmatprep.subr.bf16.mxu0 %v216
  %280 = vmatpush1.bf16.msra.mxu0 %v215
  %281 = vmatprep.subr.bf16.mxu0 %v220
  %282 = vmatpush1.bf16.msra.mxu0 %v219
  %283 = vmatprep.subr.bf16.mxu0 %v224
  %284 = vmatpush1.bf16.msra.mxu0 %v223
  %285 = vmatprep.subr.bf16.mxu0 %v228
  %286 = vmatpush1.bf16.msra.mxu0 %v227
  %287 = vmatprep.subr.bf16.mxu0 %v232
  %288 = vmatpush1.bf16.msra.mxu0 %v231
  %289 = vmatprep.subr.bf16.mxu0 %v236
  %290 = vmatpush1.bf16.msra.mxu0 %v235
  %291 = vmatprep.subr.bf16.mxu0 %v240
  %292 = vmatpush1.bf16.msra.mxu0 %v239
  %293 = vmatprep.subr.bf16.mxu0 %v244
  %294 = vmatpush1.bf16.msra.mxu0 %v243
  %295 = vmatprep.subr.bf16.mxu0 0
  %296 = vmatpush1.bf16.msra.mxu0 0
  %297 = vmatprep.subr.bf16.mxu0 0
  %298 = vmatpush1.bf16.msra.mxu0 0
  %299 = vmatprep.subr.bf16.mxu0 0
  %300 = vmatpush1.bf16.msra.mxu0 0
  %301 = vmatprep.subr.bf16.mxu0 0
  %302 = vmatpush1.bf16.msra.mxu0 0
  %303 = vmatprep.subr.bf16.mxu0 0
  %304 = vmatpush1.bf16.msra.mxu0 0
  %305 = vmatprep.subr.bf16.mxu0 0
  %306 = vmatpush1.bf16.msra.mxu0 0
  %307 = vmatprep.subr.bf16.mxu0 0
  %308 = vmatpush1.bf16.msra.mxu0 0
  %309 = vmatprep.subr.bf16.mxu0 0
  %310 = vmatpush1.bf16.msra.mxu0 0
  %311 = vmatprep.mubr.bf16.mxu0 0
  %312 = vmatmul.mubr.bf16.gmra.mrb[0].mxu0 %v30
  %v313 = vpop.f32.mrb[0].mxu0
  %v314 = vadd.f32 %v102, %v313
  %v315 = vpop.f32.mrb[0].mxu0
  %v316 = vadd.f32 %v106, %v315
  %v317 = vpop.f32.mrb[0].mxu0
  %v318 = vadd.f32 %v102, %v317
  %v319 = vpop.f32.mrb[0].mxu0
  %v320 = vadd.f32 %v106, %v319
  %321 = vmatprep.mubr.bf16.mxu0 0
  %322 = vmatmul.mubr.bf16.gmra.mrb[0].mxu0 %v31
  %v323 = vpop.f32.mrb[0].mxu0
  %v324 = vadd.f32 %v102, %v323
  %v325 = vpop.f32.mrb[0].mxu0
  %v326 = vadd.f32 %v106, %v325
  %v327 = vpop.f32.mrb[0].mxu0
  %v328 = vpop.f32.mrb[0].mxu0
  %329 = vdwg.mxu0
  %330 = vmatprep.subr.bf16.mxu0 %v218
  %331 = vmatpush1.bf16.msra.mxu0 %v217
  %332 = vmatprep.subr.bf16.mxu0 %v222
  %333 = vmatpush1.bf16.msra.mxu0 %v221
  %334 = vmatprep.subr.bf16.mxu0 %v226
  %335 = vmatpush1.bf16.msra.mxu0 %v225
  %336 = vmatprep.subr.bf16.mxu0 %v230
  %337 = vmatpush1.bf16.msra.mxu0 %v229
  %338 = vmatprep.subr.bf16.mxu0 %v234
  %339 = vmatpush1.bf16.msra.mxu0 %v233
  %340 = vmatprep.subr.bf16.mxu0 %v238
  %341 = vmatpush1.bf16.msra.mxu0 %v237
  %342 = vmatprep.subr.bf16.mxu0 %v242
  %343 = vmatpush1.bf16.msra.mxu0 %v241
  %344 = vmatprep.subr.bf16.mxu0 %v246
  %345 = vmatpush1.bf16.msra.mxu0 %v245
  %346 = vmatprep.subr.bf16.mxu0 0
  %347 = vmatpush1.bf16.msra.mxu0 0
  %348 = vmatprep.subr.bf16.mxu0 0
  %349 = vmatpush1.bf16.msra.mxu0 0
  %350 = vmatprep.subr.bf16.mxu0 0
  %351 = vmatpush1.bf16.msra.mxu0 0
  %352 = vmatprep.subr.bf16.mxu0 0
  %353 = vmatpush1.bf16.msra.mxu0 0
  %354 = vmatprep.subr.bf16.mxu0 0
  %355 = vmatpush1.bf16.msra.mxu0 0
  %356 = vmatprep.subr.bf16.mxu0 0
  %357 = vmatpush1.bf16.msra.mxu0 0
  %358 = vmatprep.subr.bf16.mxu0 0
  %359 = vmatpush1.bf16.msra.mxu0 0
  %360 = vmatprep.subr.bf16.mxu0 0
  %361 = vmatpush1.bf16.msra.mxu0 0
  %362 = vmatprep.mubr.bf16.mxu0 0
  %363 = vmatmul.mubr.bf16.gmra.mrb[0].mxu0 %v30
  %v364 = vpop.f32.mrb[0].mxu0
  %v365 = vadd.f32 %v110, %v364
  %v366 = vpop.f32.mrb[0].mxu0
  %v367 = vadd.f32 %v114, %v366
  %v368 = vpop.f32.mrb[0].mxu0
  %v369 = vadd.f32 %v110, %v368
  %v370 = vpop.f32.mrb[0].mxu0
  %v371 = vadd.f32 %v114, %v370
  %372 = vmatprep.mubr.bf16.mxu0 0
  %373 = vmatmul.mubr.bf16.gmra.mrb[0].mxu0 %v31
  %v374 = vpop.f32.mrb[0].mxu0
  %v375 = vadd.f32 %v110, %v374
  %v376 = vpop.f32.mrb[0].mxu0
  %v377 = vadd.f32 %v114, %v376
  %v378 = vpop.f32.mrb[0].mxu0
  %v379 = vpop.f32.mrb[0].mxu0
  %380 = vdwg.mxu0
  %v382 = vlaneseq
  %v383 = vshrl.u32 %v382, 7
  %v384 = vsub.s32 0, %v383
  %v385 = vrot.slane %v97, %v384
  %v386 = vlaneseq
  %v387 = vshrl.u32 %v386, 7
  %v388 = vsub.s32 1, %v387
  %v389 = vrot.slane %v97, %v388
  %v390 = vlaneseq
  %v391 = vshrl.u32 %v390, 7
  %v392 = vsub.s32 2, %v391
  %v393 = vrot.slane %v97, %v392
  %v394 = vlaneseq
  %v395 = vshrl.u32 %v394, 7
  %v396 = vsub.s32 3, %v395
  %v397 = vrot.slane %v97, %v396
  %v434 = vunpack.c.l.b16 %v65
  %v435 = vunpack.c.h.b16 %v65
  %v436 = vunpack.c.l.b16 %v66
  %v437 = vunpack.c.h.b16 %v66
  %v438 = vunpack.c.l.b16 %v67
  %v439 = vunpack.c.h.b16 %v67
  %v440 = vunpack.c.l.b16 %v68
  %v441 = vunpack.c.h.b16 %v68
  %v442 = vunpack.c.l.b16 %v69
  %v443 = vunpack.c.h.b16 %v69
  %v444 = vunpack.c.l.b16 %v70
  %v445 = vunpack.c.h.b16 %v70
  %v446 = vunpack.c.l.b16 %v71
  %v447 = vunpack.c.h.b16 %v71
  %v448 = vunpack.c.l.b16 %v72
  %v449 = vunpack.c.h.b16 %v72
  %v450 = vunpack.c.l.b16 %v73
  %v451 = vunpack.c.h.b16 %v73
  %v452 = vunpack.c.l.b16 %v74
  %v453 = vunpack.c.h.b16 %v74
  %v454 = vunpack.c.l.b16 %v75
  %v455 = vunpack.c.h.b16 %v75
  %v456 = vunpack.c.l.b16 %v76
  %v457 = vunpack.c.h.b16 %v76
  %v458 = vunpack.c.l.b16 %v77
  %v459 = vunpack.c.h.b16 %v77
  %v460 = vunpack.c.l.b16 %v78
  %v461 = vunpack.c.h.b16 %v78
  %v462 = vunpack.c.l.b16 %v79
  %v463 = vunpack.c.h.b16 %v79
  %v464 = vunpack.c.l.b16 %v80
  %v465 = vunpack.c.h.b16 %v80
  %v466 = vunpack.c.l.b16 %v81
  %v467 = vunpack.c.h.b16 %v81
  %v468 = vunpack.c.l.b16 %v82
  %v469 = vunpack.c.h.b16 %v82
  %v470 = vunpack.c.l.b16 %v83
  %v471 = vunpack.c.h.b16 %v83
  %v472 = vunpack.c.l.b16 %v84
  %v473 = vunpack.c.h.b16 %v84
  %v474 = vunpack.c.l.b16 %v85
  %v475 = vunpack.c.h.b16 %v85
  %v476 = vunpack.c.l.b16 %v86
  %v477 = vunpack.c.h.b16 %v86
  %v478 = vunpack.c.l.b16 %v87
  %v479 = vunpack.c.h.b16 %v87
  %v480 = vunpack.c.l.b16 %v88
  %v481 = vunpack.c.h.b16 %v88
  %v482 = vunpack.c.l.b16 %v89
  %v483 = vunpack.c.h.b16 %v89
  %v484 = vunpack.c.l.b16 %v90
  %v485 = vunpack.c.h.b16 %v90
  %v486 = vunpack.c.l.b16 %v91
  %v487 = vunpack.c.h.b16 %v91
  %v488 = vunpack.c.l.b16 %v92
  %v489 = vunpack.c.h.b16 %v92
  %v490 = vunpack.c.l.b16 %v93
  %v491 = vunpack.c.h.b16 %v93
  %v492 = vunpack.c.l.b16 %v94
  %v493 = vunpack.c.h.b16 %v94
  %v494 = vunpack.c.l.b16 %v95
  %v495 = vunpack.c.h.b16 %v95
  %v496 = vunpack.c.l.b16 %v96
  %v497 = vunpack.c.h.b16 %v96
  %v498 = vpack.c.b16 %v438, %v434
  %v499 = vpack.c.b16 %v439, %v435
  %v500 = vpack.c.b16 %v440, %v436
  %v501 = vpack.c.b16 %v441, %v437
  %v502 = vpack.c.b16 %v446, %v442
  %v503 = vpack.c.b16 %v447, %v443
  %v504 = vpack.c.b16 %v448, %v444
  %v505 = vpack.c.b16 %v449, %v445
  %v506 = vpack.c.b16 %v454, %v450
  %v507 = vpack.c.b16 %v455, %v451
  %v508 = vpack.c.b16 %v456, %v452
  %v509 = vpack.c.b16 %v457, %v453
  %v510 = vpack.c.b16 %v462, %v458
  %v511 = vpack.c.b16 %v463, %v459
  %v512 = vpack.c.b16 %v464, %v460
  %v513 = vpack.c.b16 %v465, %v461
  %v514 = vpack.c.b16 %v470, %v466
  %v515 = vpack.c.b16 %v471, %v467
  %v516 = vpack.c.b16 %v472, %v468
  %v517 = vpack.c.b16 %v473, %v469
  %v518 = vpack.c.b16 %v478, %v474
  %v519 = vpack.c.b16 %v479, %v475
  %v520 = vpack.c.b16 %v480, %v476
  %v521 = vpack.c.b16 %v481, %v477
  %v522 = vpack.c.b16 %v486, %v482
  %v523 = vpack.c.b16 %v487, %v483
  %v524 = vpack.c.b16 %v488, %v484
  %v525 = vpack.c.b16 %v489, %v485
  %v526 = vpack.c.b16 %v494, %v490
  %v527 = vpack.c.b16 %v495, %v491
  %v528 = vpack.c.b16 %v496, %v492
  %v529 = vpack.c.b16 %v497, %v493
  %562 = vmatprep.subr.bf16.mxu0 %v499
  %563 = vmatpush1.bf16.msra.mxu0 %v498
  %564 = vmatprep.subr.bf16.mxu0 %v503
  %565 = vmatpush1.bf16.msra.mxu0 %v502
  %566 = vmatprep.subr.bf16.mxu0 %v507
  %567 = vmatpush1.bf16.msra.mxu0 %v506
  %568 = vmatprep.subr.bf16.mxu0 %v511
  %569 = vmatpush1.bf16.msra.mxu0 %v510
  %570 = vmatprep.subr.bf16.mxu0 %v515
  %571 = vmatpush1.bf16.msra.mxu0 %v514
  %572 = vmatprep.subr.bf16.mxu0 %v519
  %573 = vmatpush1.bf16.msra.mxu0 %v518
  %574 = vmatprep.subr.bf16.mxu0 %v523
  %575 = vmatpush1.bf16.msra.mxu0 %v522
  %576 = vmatprep.subr.bf16.mxu0 %v527
  %577 = vmatpush1.bf16.msra.mxu0 %v526
  %578 = vmatprep.subr.bf16.mxu0 0
  %579 = vmatpush1.bf16.msra.mxu0 0
  %580 = vmatprep.subr.bf16.mxu0 0
  %581 = vmatpush1.bf16.msra.mxu0 0
  %582 = vmatprep.subr.bf16.mxu0 0
  %583 = vmatpush1.bf16.msra.mxu0 0
  %584 = vmatprep.subr.bf16.mxu0 0
  %585 = vmatpush1.bf16.msra.mxu0 0
  %586 = vmatprep.subr.bf16.mxu0 0
  %587 = vmatpush1.bf16.msra.mxu0 0
  %588 = vmatprep.subr.bf16.mxu0 0
  %589 = vmatpush1.bf16.msra.mxu0 0
  %590 = vmatprep.subr.bf16.mxu0 0
  %591 = vmatpush1.bf16.msra.mxu0 0
  %592 = vmatprep.subr.bf16.mxu0 0
  %593 = vmatpush1.bf16.msra.mxu0 0
  %594 = vmatprep.mubr.bf16.mxu0 0
  %595 = vmatmul.mubr.bf16.gmra.mrb[0].mxu0 %v30
  %v596 = vpop.f32.mrb[0].mxu0
  %v597 = vadd.f32 %v385, %v596
  %v598 = vpop.f32.mrb[0].mxu0
  %v599 = vadd.f32 %v389, %v598
  %v600 = vpop.f32.mrb[0].mxu0
  %v601 = vadd.f32 %v385, %v600
  %v602 = vpop.f32.mrb[0].mxu0
  %v603 = vadd.f32 %v389, %v602
  %604 = vmatprep.mubr.bf16.mxu0 0
  %605 = vmatmul.mubr.bf16.gmra.mrb[0].mxu0 %v31
  %v606 = vpop.f32.mrb[0].mxu0
  %v607 = vadd.f32 %v385, %v606
  %v608 = vpop.f32.mrb[0].mxu0
  %v609 = vadd.f32 %v389, %v608
  %v610 = vpop.f32.mrb[0].mxu0
  %v611 = vpop.f32.mrb[0].mxu0
  %612 = vdwg.mxu0
  %613 = vmatprep.subr.bf16.mxu0 %v501
  %614 = vmatpush1.bf16.msra.mxu0 %v500
  %615 = vmatprep.subr.bf16.mxu0 %v505
  %616 = vmatpush1.bf16.msra.mxu0 %v504
  %617 = vmatprep.subr.bf16.mxu0 %v509
  %618 = vmatpush1.bf16.msra.mxu0 %v508
  %619 = vmatprep.subr.bf16.mxu0 %v513
  %620 = vmatpush1.bf16.msra.mxu0 %v512
  %621 = vmatprep.subr.bf16.mxu0 %v517
  %622 = vmatpush1.bf16.msra.mxu0 %v516
  %623 = vmatprep.subr.bf16.mxu0 %v521
  %624 = vmatpush1.bf16.msra.mxu0 %v520
  %625 = vmatprep.subr.bf16.mxu0 %v525
  %626 = vmatpush1.bf16.msra.mxu0 %v524
  %627 = vmatprep.subr.bf16.mxu0 %v529
  %628 = vmatpush1.bf16.msra.mxu0 %v528
  %629 = vmatprep.subr.bf16.mxu0 0
  %630 = vmatpush1.bf16.msra.mxu0 0
  %631 = vmatprep.subr.bf16.mxu0 0
  %632 = vmatpush1.bf16.msra.mxu0 0
  %633 = vmatprep.subr.bf16.mxu0 0
  %634 = vmatpush1.bf16.msra.mxu0 0
  %635 = vmatprep.subr.bf16.mxu0 0
  %636 = vmatpush1.bf16.msra.mxu0 0
  %637 = vmatprep.subr.bf16.mxu0 0
  %638 = vmatpush1.bf16.msra.mxu0 0
  %639 = vmatprep.subr.bf16.mxu0 0
  %640 = vmatpush1.bf16.msra.mxu0 0
  %641 = vmatprep.subr.bf16.mxu0 0
  %642 = vmatpush1.bf16.msra.mxu0 0
  %643 = vmatprep.subr.bf16.mxu0 0
  %644 = vmatpush1.bf16.msra.mxu0 0
  %645 = vmatprep.mubr.bf16.mxu0 0
  %646 = vmatmul.mubr.bf16.gmra.mrb[0].mxu0 %v30
  %v647 = vpop.f32.mrb[0].mxu0
  %v648 = vadd.f32 %v393, %v647
  %v649 = vpop.f32.mrb[0].mxu0
  %v650 = vadd.f32 %v397, %v649
  %v651 = vpop.f32.mrb[0].mxu0
  %v652 = vadd.f32 %v393, %v651
  %v653 = vpop.f32.mrb[0].mxu0
  %v654 = vadd.f32 %v397, %v653
  %655 = vmatprep.mubr.bf16.mxu0 0
  %656 = vmatmul.mubr.bf16.gmra.mrb[0].mxu0 %v31
  %v657 = vpop.f32.mrb[0].mxu0
  %v658 = vadd.f32 %v393, %v657
  %v659 = vpop.f32.mrb[0].mxu0
  %v660 = vadd.f32 %v397, %v659
  %v661 = vpop.f32.mrb[0].mxu0
  %v662 = vpop.f32.mrb[0].mxu0
  %663 = vdwg.mxu0
  %v664 = vxor.u32 %v314, 2147483648
  %v665 = vxor.u32 %v316, 2147483648
  %v666 = vxor.u32 %v365, 2147483648
  %v667 = vxor.u32 %v367, 2147483648
  %v668 = vxor.u32 %v318, 2147483648
  %v669 = vxor.u32 %v320, 2147483648
  %v670 = vxor.u32 %v369, 2147483648
  %v671 = vxor.u32 %v371, 2147483648
  %v672 = vxor.u32 %v324, 2147483648
  %v673 = vxor.u32 %v326, 2147483648
  %v674 = vxor.u32 %v375, 2147483648
  %v675 = vxor.u32 %v377, 2147483648
  %v676 = vmul.f32 %v664, 1.442695
  %v677 = vpow.pop %v676
  %v678 = vmul.f32 %v665, 1.442695
  %v679 = vpow.pop %v678
  %v680 = vmul.f32 %v666, 1.442695
  %v681 = vpow.pop %v680
  %v682 = vmul.f32 %v667, 1.442695
  %v683 = vpow.pop %v682
  %v684 = vmul.f32 %v668, 1.442695
  %v685 = vpow.pop %v684
  %v686 = vmul.f32 %v669, 1.442695
  %v687 = vpow.pop %v686
  %v688 = vmul.f32 %v670, 1.442695
  %v689 = vpow.pop %v688
  %v690 = vmul.f32 %v671, 1.442695
  %v691 = vpow.pop %v690
  %v692 = vmul.f32 %v672, 1.442695
  %v693 = vpow.pop %v692
  %v694 = vmul.f32 %v673, 1.442695
  %v695 = vpow.pop %v694
  %v696 = vmul.f32 %v674, 1.442695
  %v697 = vpow.pop %v696
  %v698 = vmul.f32 %v675, 1.442695
  %v699 = vpow.pop %v698
  %v700 = vadd.f32 %v677, 1.0
  %v701 = vadd.f32 %v679, 1.0
  %v702 = vadd.f32 %v681, 1.0
  %v703 = vadd.f32 %v683, 1.0
  %v704 = vadd.f32 %v685, 1.0
  %v705 = vadd.f32 %v687, 1.0
  %v706 = vadd.f32 %v689, 1.0
  %v707 = vadd.f32 %v691, 1.0
  %v708 = vadd.f32 %v693, 1.0
  %v709 = vadd.f32 %v695, 1.0
  %v710 = vadd.f32 %v697, 1.0
  %v711 = vadd.f32 %v699, 1.0
  %v712 = vrcp.pop %v700
  %v713 = vmul.f32 1.0, %v712
  %v714 = vrcp.pop %v701
  %v715 = vmul.f32 1.0, %v714
  %v716 = vrcp.pop %v702
  %v717 = vmul.f32 1.0, %v716
  %v718 = vrcp.pop %v703
  %v719 = vmul.f32 1.0, %v718
  %v720 = vrcp.pop %v704
  %v721 = vmul.f32 1.0, %v720
  %v722 = vrcp.pop %v705
  %v723 = vmul.f32 1.0, %v722
  %v724 = vrcp.pop %v706
  %v725 = vmul.f32 1.0, %v724
  %v726 = vrcp.pop %v707
  %v727 = vmul.f32 1.0, %v726
  %v728 = vrcp.pop %v708
  %v729 = vmul.f32 1.0, %v728
  %v730 = vrcp.pop %v709
  %v731 = vmul.f32 1.0, %v730
  %v732 = vrcp.pop %v710
  %v733 = vmul.f32 1.0, %v732
  %v734 = vrcp.pop %v711
  %v735 = vmul.f32 1.0, %v734
  %v736 = vmul.f32 %v314, %v713
  %v737 = vmul.f32 %v316, %v715
  %v738 = vmul.f32 %v365, %v717
  %v739 = vmul.f32 %v367, %v719
  %v740 = vmul.f32 %v318, %v721
  %v741 = vmul.f32 %v320, %v723
  %v742 = vmul.f32 %v369, %v725
  %v743 = vmul.f32 %v371, %v727
  %v744 = vmul.f32 %v324, %v729
  %v745 = vmul.f32 %v326, %v731
  %v746 = vmul.f32 %v375, %v733
  %v747 = vmul.f32 %v377, %v735
  %v748 = vmul.f32 %v736, %v597
  %v749 = vmul.f32 %v737, %v599
  %v750 = vmul.f32 %v738, %v648
  %v751 = vmul.f32 %v739, %v650
  %v752 = vmul.f32 %v740, %v601
  %v753 = vmul.f32 %v741, %v603
  %v754 = vmul.f32 %v742, %v652
  %v755 = vmul.f32 %v743, %v654
  %v756 = vmul.f32 %v744, %v607
  %v757 = vmul.f32 %v745, %v609
  %v758 = vmul.f32 %v746, %v658
  %v759 = vmul.f32 %v747, %v660
  %v760 = vadd.f32 %v748, %v749
  %v761 = vadd.f32 %v760, %v750
  %v762 = vadd.f32 %v761, %v751
  %763 = vadd.xlane.f32.xlu0 %v762
  %v764 = vpop.xlane.xlu0 %763
  %v765 = vadd.f32 %v752, %v753
  %v766 = vadd.f32 %v765, %v754
  %v767 = vadd.f32 %v766, %v755
  %768 = vadd.xlane.f32.xlu0 %v767
  %v769 = vpop.xlane.xlu0 %768
  %v770 = vadd.f32 %v756, %v757
  %v771 = vadd.f32 %v770, %v758
  %v772 = vadd.f32 %v771, %v759
  %773 = vadd.xlane.f32.xlu0 %v772
  %v774 = vpop.xlane.xlu0 %773
  %v775 = vmul.f32 %v748, %v748
  %v776 = vmul.f32 %v749, %v749
  %v777 = vmul.f32 %v750, %v750
  %v778 = vmul.f32 %v751, %v751
  %v779 = vmul.f32 %v752, %v752
  %v780 = vmul.f32 %v753, %v753
  %v781 = vmul.f32 %v754, %v754
  %v782 = vmul.f32 %v755, %v755
  %v783 = vmul.f32 %v756, %v756
  %v784 = vmul.f32 %v757, %v757
  %v785 = vmul.f32 %v758, %v758
  %v786 = vmul.f32 %v759, %v759
  %v787 = vadd.f32 %v775, %v776
  %v788 = vadd.f32 %v787, %v777
  %v789 = vadd.f32 %v788, %v778
  %790 = vadd.xlane.f32.xlu0 %v789
  %v791 = vpop.xlane.xlu0 %790
  %v792 = vadd.f32 %v779, %v780
  %v793 = vadd.f32 %v792, %v781
  %v794 = vadd.f32 %v793, %v782
  %795 = vadd.xlane.f32.xlu0 %v794
  %v796 = vpop.xlane.xlu0 %795
  %v797 = vadd.f32 %v783, %v784
  %v798 = vadd.f32 %v797, %v785
  %v799 = vadd.f32 %v798, %v786
  %800 = vadd.xlane.f32.xlu0 %v799
  %v801 = vpop.xlane.xlu0 %800
  %v802 = vmul.f32 %v764, 0.001953125
  %v803 = vmul.f32 %v769, 0.001953125
  %v804 = vmul.f32 %v774, 0.001953125
  %v805 = vmul.f32 %v791, 0.001953125
  %v806 = vmul.f32 %v796, 0.001953125
  %v807 = vmul.f32 %v801, 0.001953125
  %v808 = vmul.f32 %v802, %v802
  %v809 = vmul.f32 %v803, %v803
  %v810 = vmul.f32 %v804, %v804
  %v811 = vsub.f32 %v805, %v808
  %v812 = vsub.f32 %v806, %v809
  %v813 = vsub.f32 %v807, %v810
  %v814 = vmax.f32 %v811, 0.0
  %v815 = vmax.f32 %v812, 0.0
  %v816 = vmax.f32 %v813, 0.0
  %v817 = vsub.f32 %v748, %v802
  %v818 = vsub.f32 %v749, %v802
  %v819 = vsub.f32 %v750, %v802
  %v820 = vsub.f32 %v751, %v802
  %v821 = vsub.f32 %v752, %v803
  %v822 = vsub.f32 %v753, %v803
  %v823 = vsub.f32 %v754, %v803
  %v824 = vsub.f32 %v755, %v803
  %v825 = vsub.f32 %v756, %v804
  %v826 = vsub.f32 %v757, %v804
  %v827 = vsub.f32 %v758, %v804
  %v828 = vsub.f32 %v759, %v804
  %v829 = vadd.f32 %v814, 1e-06
  %v830 = vadd.f32 %v815, 1e-06
  %v831 = vadd.f32 %v816, 1e-06
  %v832 = vrsqrt.pop %v829
  %v833 = vrsqrt.pop %v830
  %v834 = vrsqrt.pop %v831
  %v835 = vmul.f32 %v817, %v832
  %v836 = vmul.f32 %v818, %v832
  %v837 = vmul.f32 %v819, %v832
  %v838 = vmul.f32 %v820, %v832
  %v839 = vmul.f32 %v821, %v833
  %v840 = vmul.f32 %v822, %v833
  %v841 = vmul.f32 %v823, %v833
  %v842 = vmul.f32 %v824, %v833
  %v843 = vmul.f32 %v825, %v834
  %v844 = vmul.f32 %v826, %v834
  %v845 = vmul.f32 %v827, %v834
  %v846 = vmul.f32 %v828, %v834
  %v847 = vpack.c.bf16 %v839, %v835
  %v848 = vpack.c.bf16 %v840, %v836
  %v849 = vpack.c.bf16 %v841, %v837
  %v850 = vpack.c.bf16 %v842, %v838
  %v851 = vpack.c.bf16 %v843, %v843
  %v852 = vpack.c.bf16 %v844, %v844
  %v853 = vpack.c.bf16 %v845, %v845
  %v854 = vpack.c.bf16 %v846, %v846
  %v855 = vld [vmem:[%s5] sm:$0xf]
  %v856 = vld [vmem:[%s5 + $0x4] sm:$0xf]
  %v857 = vld [vmem:[%s5 + $0x8] sm:$0xf]
  %v858 = vld [vmem:[%s5 + $0xc] sm:$0xf]
  %v859 = vld [vmem:[%s5 + $0x10] sm:$0xf]
  %v860 = vld [vmem:[%s5 + $0x14] sm:$0xf]
  %v861 = vld [vmem:[%s5 + $0x18] sm:$0xf]
  %v862 = vld [vmem:[%s5 + $0x1c] sm:$0xf]
  %v863 = vld [vmem:[%s5 + $0x20] sm:$0xf]
  %v864 = vld [vmem:[%s5 + $0x24] sm:$0xf]
  %v865 = vld [vmem:[%s5 + $0x28] sm:$0xf]
  %v866 = vld [vmem:[%s5 + $0x2c] sm:$0xf]
  %v867 = vld [vmem:[%s5 + $0x30] sm:$0xf]
  %v868 = vld [vmem:[%s5 + $0x34] sm:$0xf]
  %v869 = vld [vmem:[%s5 + $0x38] sm:$0xf]
  %v870 = vld [vmem:[%s5 + $0x3c] sm:$0xf]
  %v871 = vld [vmem:[%s5 + $0x40] sm:$0xf]
  %v872 = vld [vmem:[%s5 + $0x44] sm:$0xf]
  %v873 = vld [vmem:[%s5 + $0x48] sm:$0xf]
  %v874 = vld [vmem:[%s5 + $0x4c] sm:$0xf]
  %v875 = vld [vmem:[%s5 + $0x50] sm:$0xf]
  %v876 = vld [vmem:[%s5 + $0x54] sm:$0xf]
  %v877 = vld [vmem:[%s5 + $0x58] sm:$0xf]
  %v878 = vld [vmem:[%s5 + $0x5c] sm:$0xf]
  %v879 = vld [vmem:[%s5 + $0x60] sm:$0xf]
  %v880 = vld [vmem:[%s5 + $0x64] sm:$0xf]
  %v881 = vld [vmem:[%s5 + $0x68] sm:$0xf]
  %v882 = vld [vmem:[%s5 + $0x6c] sm:$0xf]
  %v883 = vld [vmem:[%s5 + $0x70] sm:$0xf]
  %v884 = vld [vmem:[%s5 + $0x74] sm:$0xf]
  %v885 = vld [vmem:[%s5 + $0x78] sm:$0xf]
  %v886 = vld [vmem:[%s5 + $0x7c] sm:$0xf]
  %v887 = vld [vmem:[%s5 + $0x80] sm:$0xf]
  %v888 = vld [vmem:[%s5 + $0x84] sm:$0xf]
  %v889 = vld [vmem:[%s5 + $0x88] sm:$0xf]
  %v890 = vld [vmem:[%s5 + $0x8c] sm:$0xf]
  %v891 = vld [vmem:[%s5 + $0x90] sm:$0xf]
  %v892 = vld [vmem:[%s5 + $0x94] sm:$0xf]
  %v893 = vld [vmem:[%s5 + $0x98] sm:$0xf]
  %v894 = vld [vmem:[%s5 + $0x9c] sm:$0xf]
  %v895 = vld [vmem:[%s5 + $0xa0] sm:$0xf]
  %v896 = vld [vmem:[%s5 + $0xa4] sm:$0xf]
  %v897 = vld [vmem:[%s5 + $0xa8] sm:$0xf]
  %v898 = vld [vmem:[%s5 + $0xac] sm:$0xf]
  %v899 = vld [vmem:[%s5 + $0xb0] sm:$0xf]
  %v900 = vld [vmem:[%s5 + $0xb4] sm:$0xf]
  %v901 = vld [vmem:[%s5 + $0xb8] sm:$0xf]
  %v902 = vld [vmem:[%s5 + $0xbc] sm:$0xf]
  %v903 = vld [vmem:[%s5 + $0xc0] sm:$0xf]
  %v904 = vld [vmem:[%s5 + $0xc4] sm:$0xf]
  %v905 = vld [vmem:[%s5 + $0xc8] sm:$0xf]
  %v906 = vld [vmem:[%s5 + $0xcc] sm:$0xf]
  %v907 = vld [vmem:[%s5 + $0xd0] sm:$0xf]
  %v908 = vld [vmem:[%s5 + $0xd4] sm:$0xf]
  %v909 = vld [vmem:[%s5 + $0xd8] sm:$0xf]
  %v910 = vld [vmem:[%s5 + $0xdc] sm:$0xf]
  %v911 = vld [vmem:[%s5 + $0xe0] sm:$0xf]
  %v912 = vld [vmem:[%s5 + $0xe4] sm:$0xf]
  %v913 = vld [vmem:[%s5 + $0xe8] sm:$0xf]
  %v914 = vld [vmem:[%s5 + $0xec] sm:$0xf]
  %v915 = vld [vmem:[%s5 + $0xf0] sm:$0xf]
  %v916 = vld [vmem:[%s5 + $0xf4] sm:$0xf]
  %v917 = vld [vmem:[%s5 + $0xf8] sm:$0xf]
  %v918 = vld [vmem:[%s5 + $0xfc] sm:$0xf]
  %v919 = vld [vmem:[%s6] sm:$0x1]
  %v921 = vlaneseq
  %v922 = vshrl.u32 %v921, 7
  %v923 = vsub.s32 0, %v922
  %v924 = vrot.slane %v919, %v923
  %v990 = vunpack.c.l.b16 %v855
  %v991 = vunpack.c.l.b16 %v856
  %v992 = vunpack.c.l.b16 %v857
  %v993 = vunpack.c.l.b16 %v858
  %v994 = vunpack.c.l.b16 %v859
  %v995 = vunpack.c.l.b16 %v860
  %v996 = vunpack.c.l.b16 %v861
  %v997 = vunpack.c.l.b16 %v862
  %v998 = vunpack.c.l.b16 %v863
  %v999 = vunpack.c.l.b16 %v864
  %v1000 = vunpack.c.l.b16 %v865
  %v1001 = vunpack.c.l.b16 %v866
  %v1002 = vunpack.c.l.b16 %v867
  %v1003 = vunpack.c.l.b16 %v868
  %v1004 = vunpack.c.l.b16 %v869
  %v1005 = vunpack.c.l.b16 %v870
  %v1006 = vunpack.c.l.b16 %v871
  %v1007 = vunpack.c.l.b16 %v872
  %v1008 = vunpack.c.l.b16 %v873
  %v1009 = vunpack.c.l.b16 %v874
  %v1010 = vunpack.c.l.b16 %v875
  %v1011 = vunpack.c.l.b16 %v876
  %v1012 = vunpack.c.l.b16 %v877
  %v1013 = vunpack.c.l.b16 %v878
  %v1014 = vunpack.c.l.b16 %v879
  %v1015 = vunpack.c.l.b16 %v880
  %v1016 = vunpack.c.l.b16 %v881
  %v1017 = vunpack.c.l.b16 %v882
  %v1018 = vunpack.c.l.b16 %v883
  %v1019 = vunpack.c.l.b16 %v884
  %v1020 = vunpack.c.l.b16 %v885
  %v1021 = vunpack.c.l.b16 %v886
  %v1022 = vunpack.c.l.b16 %v887
  %v1023 = vunpack.c.l.b16 %v888
  %v1024 = vunpack.c.l.b16 %v889
  %v1025 = vunpack.c.l.b16 %v890
  %v1026 = vunpack.c.l.b16 %v891
  %v1027 = vunpack.c.l.b16 %v892
  %v1028 = vunpack.c.l.b16 %v893
  %v1029 = vunpack.c.l.b16 %v894
  %v1030 = vunpack.c.l.b16 %v895
  %v1031 = vunpack.c.l.b16 %v896
  %v1032 = vunpack.c.l.b16 %v897
  %v1033 = vunpack.c.l.b16 %v898
  %v1034 = vunpack.c.l.b16 %v899
  %v1035 = vunpack.c.l.b16 %v900
  %v1036 = vunpack.c.l.b16 %v901
  %v1037 = vunpack.c.l.b16 %v902
  %v1038 = vunpack.c.l.b16 %v903
  %v1039 = vunpack.c.l.b16 %v904
  %v1040 = vunpack.c.l.b16 %v905
  %v1041 = vunpack.c.l.b16 %v906
  %v1042 = vunpack.c.l.b16 %v907
  %v1043 = vunpack.c.l.b16 %v908
  %v1044 = vunpack.c.l.b16 %v909
  %v1045 = vunpack.c.l.b16 %v910
  %v1046 = vunpack.c.l.b16 %v911
  %v1047 = vunpack.c.l.b16 %v912
  %v1048 = vunpack.c.l.b16 %v913
  %v1049 = vunpack.c.l.b16 %v914
  %v1050 = vunpack.c.l.b16 %v915
  %v1051 = vunpack.c.l.b16 %v916
  %v1052 = vunpack.c.l.b16 %v917
  %v1053 = vunpack.c.l.b16 %v918
  %v1054 = vpack.c.b16 %v991, %v990
  %v1055 = vpack.c.b16 %v993, %v992
  %v1056 = vpack.c.b16 %v995, %v994
  %v1057 = vpack.c.b16 %v997, %v996
  %v1058 = vpack.c.b16 %v999, %v998
  %v1059 = vpack.c.b16 %v1001, %v1000
  %v1060 = vpack.c.b16 %v1003, %v1002
  %v1061 = vpack.c.b16 %v1005, %v1004
  %v1062 = vpack.c.b16 %v1007, %v1006
  %v1063 = vpack.c.b16 %v1009, %v1008
  %v1064 = vpack.c.b16 %v1011, %v1010
  %v1065 = vpack.c.b16 %v1013, %v1012
  %v1066 = vpack.c.b16 %v1015, %v1014
  %v1067 = vpack.c.b16 %v1017, %v1016
  %v1068 = vpack.c.b16 %v1019, %v1018
  %v1069 = vpack.c.b16 %v1021, %v1020
  %v1070 = vpack.c.b16 %v1023, %v1022
  %v1071 = vpack.c.b16 %v1025, %v1024
  %v1072 = vpack.c.b16 %v1027, %v1026
  %v1073 = vpack.c.b16 %v1029, %v1028
  %v1074 = vpack.c.b16 %v1031, %v1030
  %v1075 = vpack.c.b16 %v1033, %v1032
  %v1076 = vpack.c.b16 %v1035, %v1034
  %v1077 = vpack.c.b16 %v1037, %v1036
  %v1078 = vpack.c.b16 %v1039, %v1038
  %v1079 = vpack.c.b16 %v1041, %v1040
  %v1080 = vpack.c.b16 %v1043, %v1042
  %v1081 = vpack.c.b16 %v1045, %v1044
  %v1082 = vpack.c.b16 %v1047, %v1046
  %v1083 = vpack.c.b16 %v1049, %v1048
  %v1084 = vpack.c.b16 %v1051, %v1050
  %v1085 = vpack.c.b16 %v1053, %v1052
  %1118 = vmatprep.subr.bf16.mxu0 0
  %1119 = vmatpush1.bf16.msra.mxu0 %v1054
  %1120 = vmatprep.subr.bf16.mxu0 0
  %1121 = vmatpush1.bf16.msra.mxu0 %v1055
  %1122 = vmatprep.subr.bf16.mxu0 0
  %1123 = vmatpush1.bf16.msra.mxu0 %v1056
  %1124 = vmatprep.subr.bf16.mxu0 0
  %1125 = vmatpush1.bf16.msra.mxu0 %v1057
  %1126 = vmatprep.subr.bf16.mxu0 0
  %1127 = vmatpush1.bf16.msra.mxu0 %v1058
  %1128 = vmatprep.subr.bf16.mxu0 0
  %1129 = vmatpush1.bf16.msra.mxu0 %v1059
  %1130 = vmatprep.subr.bf16.mxu0 0
  %1131 = vmatpush1.bf16.msra.mxu0 %v1060
  %1132 = vmatprep.subr.bf16.mxu0 0
  %1133 = vmatpush1.bf16.msra.mxu0 %v1061
  %1134 = vmatprep.subr.bf16.mxu0 0
  %1135 = vmatpush1.bf16.msra.mxu0 %v1062
  %1136 = vmatprep.subr.bf16.mxu0 0
  %1137 = vmatpush1.bf16.msra.mxu0 %v1063
  %1138 = vmatprep.subr.bf16.mxu0 0
  %1139 = vmatpush1.bf16.msra.mxu0 %v1064
  %1140 = vmatprep.subr.bf16.mxu0 0
  %1141 = vmatpush1.bf16.msra.mxu0 %v1065
  %1142 = vmatprep.subr.bf16.mxu0 0
  %1143 = vmatpush1.bf16.msra.mxu0 %v1066
  %1144 = vmatprep.subr.bf16.mxu0 0
  %1145 = vmatpush1.bf16.msra.mxu0 %v1067
  %1146 = vmatprep.subr.bf16.mxu0 0
  %1147 = vmatpush1.bf16.msra.mxu0 %v1068
  %1148 = vmatprep.subr.bf16.mxu0 0
  %1149 = vmatpush1.bf16.msra.mxu0 %v1069
  %1150 = vmatprep.mubr.bf16.mxu0 %v848
  %1151 = vmatmul.mubr.bf16.gmra.mrb[0].mxu0 %v847
  %v1152 = vpop.f32.mrb[0].mxu0
  %v1153 = vadd.f32 %v924, %v1152
  %v1154 = vpop.f32.mrb[0].mxu0
  %v1155 = vpop.f32.mrb[0].mxu0
  %v1156 = vadd.f32 %v924, %v1155
  %v1157 = vpop.f32.mrb[0].mxu0
  %1158 = vmatprep.mubr.bf16.mxu0 %v852
  %1159 = vmatmul.mubr.bf16.gmra.mrb[0].mxu0 %v851
  %v1160 = vpop.f32.mrb[0].mxu0
  %v1161 = vadd.f32 %v924, %v1160
  %v1162 = vpop.f32.mrb[0].mxu0
  %v1163 = vpop.f32.mrb[0].mxu0
  %v1164 = vpop.f32.mrb[0].mxu0
  %1165 = vdwg.mxu0
  %1166 = vmatprep.subr.bf16.mxu0 0
  %1167 = vmatpush1.bf16.msra.mxu0 %v1070
  %1168 = vmatprep.subr.bf16.mxu0 0
  %1169 = vmatpush1.bf16.msra.mxu0 %v1071
  %1170 = vmatprep.subr.bf16.mxu0 0
  %1171 = vmatpush1.bf16.msra.mxu0 %v1072
  %1172 = vmatprep.subr.bf16.mxu0 0
  %1173 = vmatpush1.bf16.msra.mxu0 %v1073
  %1174 = vmatprep.subr.bf16.mxu0 0
  %1175 = vmatpush1.bf16.msra.mxu0 %v1074
  %1176 = vmatprep.subr.bf16.mxu0 0
  %1177 = vmatpush1.bf16.msra.mxu0 %v1075
  %1178 = vmatprep.subr.bf16.mxu0 0
  %1179 = vmatpush1.bf16.msra.mxu0 %v1076
  %1180 = vmatprep.subr.bf16.mxu0 0
  %1181 = vmatpush1.bf16.msra.mxu0 %v1077
  %1182 = vmatprep.subr.bf16.mxu0 0
  %1183 = vmatpush1.bf16.msra.mxu0 %v1078
  %1184 = vmatprep.subr.bf16.mxu0 0
  %1185 = vmatpush1.bf16.msra.mxu0 %v1079
  %1186 = vmatprep.subr.bf16.mxu0 0
  %1187 = vmatpush1.bf16.msra.mxu0 %v1080
  %1188 = vmatprep.subr.bf16.mxu0 0
  %1189 = vmatpush1.bf16.msra.mxu0 %v1081
  %1190 = vmatprep.subr.bf16.mxu0 0
  %1191 = vmatpush1.bf16.msra.mxu0 %v1082
  %1192 = vmatprep.subr.bf16.mxu0 0
  %1193 = vmatpush1.bf16.msra.mxu0 %v1083
  %1194 = vmatprep.subr.bf16.mxu0 0
  %1195 = vmatpush1.bf16.msra.mxu0 %v1084
  %1196 = vmatprep.subr.bf16.mxu0 0
  %1197 = vmatpush1.bf16.msra.mxu0 %v1085
  %1198 = vmatprep.mubr.bf16.mxu0 %v850
  %1199 = vmatmul.mubr.bf16.gmra.mrb[0].mxu0 %v849
  %v1200 = vpop.f32.mrb[0].mxu0
  %v1201 = vadd.f32 %v1153, %v1200
  %v1202 = vpop.f32.mrb[0].mxu0
  %v1203 = vpop.f32.mrb[0].mxu0
  %v1204 = vadd.f32 %v1156, %v1203
  %v1205 = vpop.f32.mrb[0].mxu0
  %1206 = vmatprep.mubr.bf16.mxu0 %v854
  %1207 = vmatmul.mubr.bf16.gmra.mrb[0].mxu0 %v853
  %v1208 = vpop.f32.mrb[0].mxu0
  %v1209 = vadd.f32 %v1161, %v1208
  %v1210 = vpop.f32.mrb[0].mxu0
  %v1211 = vpop.f32.mrb[0].mxu0
  %v1212 = vpop.f32.mrb[0].mxu0
  %1213 = vdwg.mxu0
  %v1214 = vpack.c.bf16 %v1204, %v1201
  %v1215 = vpack.c.bf16 %v1209, %v1209
  %v1218 = vunpack.c.l.b16 %v1214
  %v1219 = vunpack.c.h.b16 %v1214
  %v1220 = vunpack.c.l.b16 %v1215
  %v1221 = vpack.c.b16 %v1218, %v1218
  %v1222 = vpack.c.b16 %v1219, %v1219
  %v1223 = vpack.c.b16 %v1220, %v1220
  %1227 = vst [vmem:[%s7] sm:$0xf] %v1221
  %1228 = vst [vmem:[%s7 + $0x4] sm:$0xf] %v1222
  %1229 = vst [vmem:[%s7 + $0x8] sm:$0xf] %v1223
  // Predicated region
  $region30: #{visual_mlp.1} parent=0 // pred_check
    _
  $region31: #{visual_mlp.1} parent=0 // pred_check_branch
    %1231 = sbr.rel (0) target = $region33
  $region32: #{visual_mlp.1} parent=0 // pred_region
    _
  $region33: #{visual_mlp.1} parent=0 // pred_fallthru
    _
  // Predicated region
  $region34: #{visual_mlp.1} parent=0 // pred_check
    _
  $region35: #{visual_mlp.1} parent=0 // pred_check_branch
    %1233 = sbr.rel (0) target = $region37
  $region36: #{visual_mlp.1} parent=0 // pred_region
    _
  $region37: #{visual_mlp.1} parent=0 // pred_fallthru
    _

</llo_original>
